<compile_context>
chip_gen: v7x
topology: tpu7x:2x2x1
jax: 0.10.0
libtpu: 0.0.40
codegen_flags: <defaults>
</compile_context>

<pallas_src>
import functools

import jax
import jax.numpy as jnp
from jax.experimental import pallas as pl
from jax.experimental.pallas import tpu as pltpu


def net2_kernel(xT_ref, w1T_ref, b1_ref, w2T_ref, b2_ref, o_ref):
    xT = xT_ref[...]            # (4,  Bt) f32, batch on lanes
    w1T = w1T_ref[...]          # (40, 4)  f32

    # fc1 on the VPU: K=4 contraction as 4 broadcast multiply-adds.
    # Accumulator starts at the broadcast bias, so the bias add is free.
    h = b1_ref[...] + w1T[:, 0:1] * xT[0:1, :]          # (40, Bt)
    for k in range(1, 4):                               # tiny, unrolled at trace time
        h = h + w1T[:, k:k + 1] * xT[k:k + 1, :]
    h = jnp.maximum(h, 0.0)                             # ReLU (VPU)

    # fc2 on the MXU: (2,40) @ (40,Bt) -> (2,Bt); output lane-dense in batch.
    y = b2_ref[...] + jnp.dot(w2T_ref[...], h, preferred_element_type=jnp.float32)
    o_ref[...] = y.astype(o_ref.dtype)


def _round_up(n, m):
    return pl.cdiv(n, m) * m


@functools.partial(jax.jit, static_argnames=("block_b",))
def net2_forward(x, w1, b1, w2, b2, *, block_b=256):
    """y = relu(x @ w1 + b1) @ w2 + b2  (same semantics as PyTorch Net2).

    x: (B, 4) f32, w1: (4, 40), b1: (40,), w2: (40, 2), b2: (2,)
    """
    B, in_dim = x.shape
    hidden = w1.shape[1]
    out_dim = w2.shape[1]

    # Batch block on the lane axis: multiple of 128, but never larger than the
    # (128-rounded) batch so small batches are not over-padded.
    bt = min(block_b, _round_up(B, 128))
    Bp = _round_up(B, bt)                                # pad batch to whole blocks
    xT = jnp.pad(x, ((0, Bp - B), (0, 0))).T             # (4, Bp), batch on lanes

    # Weights stored (out, in) in the wrapper so no in-kernel transpose.
    w1T = w1.T                                           # (40, 4)
    w2T = w2.T                                           # (2, 40)
    b1c = b1.reshape(hidden, 1)                          # (40, 1)
    b2c = b2.reshape(out_dim, 1)                         # (2, 1)

    weight_bytes = (w1.size + b1.size + w2.size + b2.size) * 4
    cost = pl.CostEstimate(
        flops=2 * Bp * (in_dim * hidden + hidden * out_dim),
        transcendentals=0,
        bytes_accessed=Bp * (in_dim + out_dim) * 4 + weight_bytes,
    )

    yT = pl.pallas_call(
        net2_kernel,
        out_shape=jax.ShapeDtypeStruct((out_dim, Bp), jnp.float32),
        grid=(Bp // bt,),
        in_specs=[
            pl.BlockSpec((in_dim, bt), lambda i: (0, i)),       # xT: blocked on batch
            pl.BlockSpec((hidden, in_dim), lambda i: (0, 0)),   # w1T: replicated
            pl.BlockSpec((hidden, 1), lambda i: (0, 0)),        # b1
            pl.BlockSpec((out_dim, hidden), lambda i: (0, 0)),  # w2T
            pl.BlockSpec((out_dim, 1), lambda i: (0, 0)),       # b2
        ],
        out_specs=pl.BlockSpec((out_dim, bt), lambda i: (0, i)),
        compiler_params=pltpu.CompilerParams(
            dimension_semantics=("parallel",),   # dual-TC split on v7x
        ),
        cost_estimate=cost,
    )(xT, w1T, b1c, w2T, b2c)

    return yT.T[:B]                                      # (B, 2)


def init_params(key):
    # Mimic PyTorch nn.Linear default init: U(-1/sqrt(fan_in), 1/sqrt(fan_in))
    k1, k2, k3, k4 = jax.random.split(key, 4)
    bound1 = 1.0 / jnp.sqrt(4.0)
    bound2 = 1.0 / jnp.sqrt(40.0)
    w1 = jax.random.uniform(k1, (4, 40), jnp.float32, -bound1, bound1)
    b1 = jax.random.uniform(k2, (40,), jnp.float32, -bound1, bound1)
    w2 = jax.random.uniform(k3, (40, 2), jnp.float32, -bound2, bound2)
    b2 = jax.random.uniform(k4, (2,), jnp.float32, -bound2, bound2)
    return w1, b1, w2, b2


if __name__ == "__main__":
    key = jax.random.PRNGKey(0)
    kx, kp = jax.random.split(key)
    # CartPole state = 4 features.  Batch 512 keeps the lane axis dense,
    # amortises per-call overhead, and gives a 2-block parallel grid.
    B = 512
    x = jax.random.normal(kx, (B, 4), dtype=jnp.float32)
    w1, b1, w2, b2 = init_params(kp)

    out = jax.block_until_ready(net2_forward(x, w1, b1, w2, b2))

    # Reference check in plain JAX (same semantics as the PyTorch forward).
    ref = jnp.maximum(x @ w1 + b1[None, :], 0.0) @ w2 + b2[None, :]
    assert out.shape == (B, 2)
    assert jnp.allclose(out, ref, atol=1e-5, rtol=1e-5)

    # Also exercise a small, non-multiple-of-128 batch (padding path).
    xs = jax.random.normal(kx, (37, 4), dtype=jnp.float32)
    outs = jax.block_until_ready(net2_forward(xs, w1, b1, w2, b2))
    refs = jnp.maximum(xs @ w1 + b1[None, :], 0.0) @ w2 + b2[None, :]
    assert outs.shape == (37, 2)
    assert jnp.allclose(outs, refs, atol=1e-5, rtol=1e-5)

    print("KERNEL_OK")
</pallas_src>

<mosaic_0001>
module attributes {stable_mosaic.version = 11 : i64} {
  func.func @net2_kernel(%arg0: i32, %arg1: memref<4x256xf32, #tpu.memory_space<vmem>>, %arg2: memref<40x4xf32, #tpu.memory_space<vmem>>, %arg3: memref<40x1xf32, #tpu.memory_space<vmem>>, %arg4: memref<2x40xf32, #tpu.memory_space<vmem>>, %arg5: memref<2x1xf32, #tpu.memory_space<vmem>>, %arg6: memref<2x256xf32, #tpu.memory_space<vmem>>) attributes {dimension_semantics = [#tpu.dimension_semantics<parallel>], iteration_bounds = array<i64: 2>, scalar_prefetch = 0 : i64, scratch_operands = 0 : i64, tpu.core_type = #tpu.core_type<tc>, window_params = [{transform_indices = @transform_0, window_bounds = array<i64: 4, 256>}, {pipeline_mode = #tpu.pipeline_mode<synchronous>, transform_indices = @transform_1, window_bounds = array<i64: 40, 4>}, {pipeline_mode = #tpu.pipeline_mode<synchronous>, transform_indices = @transform_2, window_bounds = array<i64: 40, 1>}, {pipeline_mode = #tpu.pipeline_mode<synchronous>, transform_indices = @transform_3, window_bounds = array<i64: 2, 40>}, {pipeline_mode = #tpu.pipeline_mode<synchronous>, transform_indices = @transform_4, window_bounds = array<i64: 2, 1>}, {transform_indices = @transform_5, window_bounds = array<i64: 2, 256>}]} {
    %c0 = arith.constant 0 : index
    %c0_0 = arith.constant 0 : index
    %0 = vector.load %arg1[%c0, %c0_0] : memref<4x256xf32, #tpu.memory_space<vmem>>, vector<4x256xf32>
    %c0_1 = arith.constant 0 : index
    %c0_2 = arith.constant 0 : index
    %1 = vector.load %arg2[%c0_1, %c0_2] : memref<40x4xf32, #tpu.memory_space<vmem>>, vector<40x4xf32>
    %c0_3 = arith.constant 0 : index
    %c0_4 = arith.constant 0 : index
    %2 = vector.load %arg3[%c0_3, %c0_4] : memref<40x1xf32, #tpu.memory_space<vmem>>, vector<40x1xf32>
    %3 = vector.extract_strided_slice %1 {offsets = [0, 0], sizes = [40, 1], strides = [1, 1]} : vector<40x4xf32> to vector<40x1xf32>
    %4 = vector.extract_strided_slice %0 {offsets = [0, 0], sizes = [1, 256], strides = [1, 1]} : vector<4x256xf32> to vector<1x256xf32>
    %5 = vector.broadcast %3 : vector<40x1xf32> to vector<40x256xf32>
    %6 = vector.broadcast %4 : vector<1x256xf32> to vector<40x256xf32>
    %7 = arith.mulf %5, %6 : vector<40x256xf32>
    %8 = vector.broadcast %2 : vector<40x1xf32> to vector<40x256xf32>
    %9 = arith.addf %8, %7 : vector<40x256xf32>
    %10 = vector.extract_strided_slice %1 {offsets = [0, 1], sizes = [40, 1], strides = [1, 1]} : vector<40x4xf32> to vector<40x1xf32>
    %11 = vector.extract_strided_slice %0 {offsets = [1, 0], sizes = [1, 256], strides = [1, 1]} : vector<4x256xf32> to vector<1x256xf32>
    %12 = vector.broadcast %10 : vector<40x1xf32> to vector<40x256xf32>
    %13 = vector.broadcast %11 : vector<1x256xf32> to vector<40x256xf32>
    %14 = arith.mulf %12, %13 : vector<40x256xf32>
    %15 = arith.addf %9, %14 : vector<40x256xf32>
    %16 = vector.extract_strided_slice %1 {offsets = [0, 2], sizes = [40, 1], strides = [1, 1]} : vector<40x4xf32> to vector<40x1xf32>
    %17 = vector.extract_strided_slice %0 {offsets = [2, 0], sizes = [1, 256], strides = [1, 1]} : vector<4x256xf32> to vector<1x256xf32>
    %18 = vector.broadcast %16 : vector<40x1xf32> to vector<40x256xf32>
    %19 = vector.broadcast %17 : vector<1x256xf32> to vector<40x256xf32>
    %20 = arith.mulf %18, %19 : vector<40x256xf32>
    %21 = arith.addf %15, %20 : vector<40x256xf32>
    %22 = vector.extract_strided_slice %1 {offsets = [0, 3], sizes = [40, 1], strides = [1, 1]} : vector<40x4xf32> to vector<40x1xf32>
    %23 = vector.extract_strided_slice %0 {offsets = [3, 0], sizes = [1, 256], strides = [1, 1]} : vector<4x256xf32> to vector<1x256xf32>
    %24 = vector.broadcast %22 : vector<40x1xf32> to vector<40x256xf32>
    %25 = vector.broadcast %23 : vector<1x256xf32> to vector<40x256xf32>
    %26 = arith.mulf %24, %25 : vector<40x256xf32>
    %27 = arith.addf %21, %26 : vector<40x256xf32>
    %cst = arith.constant 0.000000e+00 : f32
    %28 = vector.broadcast %cst : f32 to vector<40x256xf32>
    %29 = arith.maximumf %27, %28 : vector<40x256xf32>
    %c0_5 = arith.constant 0 : index
    %c0_6 = arith.constant 0 : index
    %30 = vector.load %arg5[%c0_5, %c0_6] : memref<2x1xf32, #tpu.memory_space<vmem>>, vector<2x1xf32>
    %c0_7 = arith.constant 0 : index
    %c0_8 = arith.constant 0 : index
    %31 = vector.load %arg4[%c0_7, %c0_8] : memref<2x40xf32, #tpu.memory_space<vmem>>, vector<2x40xf32>
    %cst_9 = arith.constant dense<0.000000e+00> : vector<2x256xf32>
    %32 = tpu.matmul %31, %29, %cst_9 {dimension_numbers = #tpu.dot_dimension_numbers<[1], [0], [0], [1], [0, 0, 1, 1], [], []>} : vector<2x40xf32>, vector<40x256xf32>, vector<2x256xf32> -> vector<2x256xf32>
    %33 = vector.broadcast %30 : vector<2x1xf32> to vector<2x256xf32>
    %34 = arith.addf %33, %32 : vector<2x256xf32>
    %c0_10 = arith.constant 0 : index
    %c0_11 = arith.constant 0 : index
    %35 = vector.load %arg6[%c0_10, %c0_11] : memref<2x256xf32, #tpu.memory_space<vmem>>, vector<2x256xf32>
    tpu.vector_store %arg6[%c0_10, %c0_11], %34 {strides = array<i32>} : memref<2x256xf32, #tpu.memory_space<vmem>>, vector<2x256xf32>,
    return
  }
  func.func @transform_0(%arg0: i32) -> (i32, i32) {
    %c0_i32 = arith.constant 0 : i32
    %c0_i32_0 = arith.constant 0 : i32
    return %c0_i32, %arg0 : i32, i32
  }
  func.func @transform_1(%arg0: i32) -> (i32, i32) {
    %c0_i32 = arith.constant 0 : i32
    %c0_i32_0 = arith.constant 0 : i32
    %c0_i32_1 = arith.constant 0 : i32
    return %c0_i32, %c0_i32_0 : i32, i32
  }
  func.func @transform_2(%arg0: i32) -> (i32, i32) {
    %c0_i32 = arith.constant 0 : i32
    %c0_i32_0 = arith.constant 0 : i32
    %c0_i32_1 = arith.constant 0 : i32
    return %c0_i32, %c0_i32_0 : i32, i32
  }
  func.func @transform_3(%arg0: i32) -> (i32, i32) {
    %c0_i32 = arith.constant 0 : i32
    %c0_i32_0 = arith.constant 0 : i32
    %c0_i32_1 = arith.constant 0 : i32
    return %c0_i32, %c0_i32_0 : i32, i32
  }
  func.func @transform_4(%arg0: i32) -> (i32, i32) {
    %c0_i32 = arith.constant 0 : i32
    %c0_i32_0 = arith.constant 0 : i32
    %c0_i32_1 = arith.constant 0 : i32
    return %c0_i32, %c0_i32_0 : i32, i32
  }
  func.func @transform_5(%arg0: i32) -> (i32, i32) {
    %c0_i32 = arith.constant 0 : i32
    %c0_i32_0 = arith.constant 0 : i32
    return %c0_i32, %arg0 : i32, i32
  }
}

</mosaic_0001>

<llo_original>
// kernel: net2_forward.1
$region0: #{net2_forward.1}
  #allocation0 [shape = 'u32[]', space=smem, size = 0x4, offset = 0x4, fixed_abs, tag = 'smem constant byte address 0x4 - core index']
  #allocation1 [shape = 'u32[144,128]{1,0:T(1,128)}', space=vmem, size = 0x12000, scoped, tag = 'internal scratch']
  %s0 = inlined_call_operand.vmem [shape: f32[4,512], index: 0, kind: input, shape index: {}]
  %s1 = inlined_call_operand.vmem [shape: f32[40,4], index: 1, kind: input, shape index: {}]
  %s2 = inlined_call_operand.vmem [shape: f32[40,1], index: 2, kind: input, shape index: {}]
  %s3 = inlined_call_operand.vmem [shape: f32[2,40], index: 3, kind: input, shape index: {}]
  %s4 = inlined_call_operand.vmem [shape: f32[2,1], index: 4, kind: input, shape index: {}]
  %s5 = inlined_call_operand.hbm [shape: f32[2,512], index: 5, kind: output, shape index: {}]
  %s6 = sld [smem:[#allocation0]]
  $region53: #{net2_forward.1} parent=0
    _
  %s8 = ssub.s32 1, %s6
  %s9 = scalar_select 0, %s8, %s6
  $region1: #{net2_forward.1} parent=0
    #allocation2 [shape = 'u8[4096]{0}', space=vmem, size = 0x1000, scoped, tag = 'output window, operand 0']
    #allocation3 [shape = 's32[2]{0}', space=sflag, size = 0x8, scoped, tag = 'scoped memory for net2_forward.1']
    %10 = vsyncpa [#allocation3], 0
    %s11 = scalar_lea.sflag [#allocation3], 1
    %12 = vsyncpa %s11, 0
    loop: start=0, step=1, limit=4
    $region2: #{net2_forward.1} parent=1 // loop_pre_header
      _
    $region3: #{net2_forward.1} parent=1 // loop_header
      %s14 = sphi 0, %s18
      %p15 = scmp.ge.s32.totalorder %s14, 4
      %s24 = sphi 0, %s26
      %s27 = sphi 0, %s24
      %s28 = sphi 0, %s27
      %s44 = sphi 0, %s28
      %s48 = sphi 0, %s48
      %s50 = sphi 0, %s48
      %s51 = sphi 0, %s50
      %s65 = sphi 0, %s51
      %s69 = sphi 0, %s69
      %s71 = sphi 0, %s69
      %s72 = sphi 0, %s71
      %s86 = sphi 0, %s72
      %s90 = sphi 0, %s90
      %s92 = sphi 0, %s90
      %s93 = sphi 0, %s92
      %s107 = sphi 0, %s93
      %s111 = sphi 0, %s111
      %s113 = sphi 0, %s111
      %s114 = sphi 0, %s113
      %s128 = sphi 0, %s114
      %s134 = sphi 0, %s136
      %s137 = sphi 0, %s134
      %s138 = sphi 0, %s137
      %s154 = sphi 0, %s138
    $region4: #{net2_forward.1} parent=1 // loop_header_branch
      %17 = sbr.rel (%p15) target = $region8
    $region5: #{net2_forward.1} parent=1 // loop_body
      %s19 = ssub.s32 %s14, 1
      %s20 = ssub.s32 %s14, 2
      %s21 = sadd.s32 %s14, 1
      %s22 = ssub.s32 %s14, %s21
      %p23 = scmp.eq.s32.totalorder %s22, 0
      %s25 = sadd.s32 %s24, 1
      %s26 = scalar_select %p23, %s24, %s25
      %p29 = pneg %p23
      %p30 = scmp.eq.s32.totalorder %s14, 1
      %p31 = por %p29, %p30
      %p32 = scmp.ne.s32.totalorder %s24, %s27
      %p33 = scmp.eq.s32.totalorder %s14, 0
      %p34 = por %p32, %p33
      %p35 = scmp.ne.s32.totalorder %s24, %s27
      %p36 = scmp.eq.s32.totalorder %s19, 1
      %p37 = por %p35, %p36
      %p38 = scmp.ne.s32.totalorder %s27, %s28
      %p39 = scmp.eq.s32.totalorder %s19, 0
      %p40 = por %p38, %p39
      %p41 = scmp.ne.s32.totalorder %s27, %s28
      %p42 = scmp.eq.s32.totalorder %s20, 1
      %p43 = por %p41, %p42
      %p45 = scmp.ne.s32.totalorder %s28, %s44
      %p46 = scmp.eq.s32.totalorder %s20, 0
      %p47 = por %p45, %p46
      %s49 = sadd.s32 %s48, 1
      %p52 = scmp.eq.s32.totalorder %s14, 1
      %p53 = scmp.ne.s32.totalorder %s48, %s50
      %p54 = scmp.eq.s32.totalorder %s14, 0
      %p55 = por %p53, %p54
      %p56 = scmp.ne.s32.totalorder %s48, %s50
      %p57 = scmp.eq.s32.totalorder %s19, 1
      %p58 = por %p56, %p57
      %p59 = scmp.ne.s32.totalorder %s50, %s51
      %p60 = scmp.eq.s32.totalorder %s19, 0
      %p61 = por %p59, %p60
      %p62 = scmp.ne.s32.totalorder %s50, %s51
      %p63 = scmp.eq.s32.totalorder %s20, 1
      %p64 = por %p62, %p63
      %p66 = scmp.ne.s32.totalorder %s51, %s65
      %p67 = scmp.eq.s32.totalorder %s20, 0
      %p68 = por %p66, %p67
      %s70 = sadd.s32 %s69, 1
      %p73 = scmp.eq.s32.totalorder %s14, 1
      %p74 = scmp.ne.s32.totalorder %s69, %s71
      %p75 = scmp.eq.s32.totalorder %s14, 0
      %p76 = por %p74, %p75
      %p77 = scmp.ne.s32.totalorder %s69, %s71
      %p78 = scmp.eq.s32.totalorder %s19, 1
      %p79 = por %p77, %p78
      %p80 = scmp.ne.s32.totalorder %s71, %s72
      %p81 = scmp.eq.s32.totalorder %s19, 0
      %p82 = por %p80, %p81
      %p83 = scmp.ne.s32.totalorder %s71, %s72
      %p84 = scmp.eq.s32.totalorder %s20, 1
      %p85 = por %p83, %p84
      %p87 = scmp.ne.s32.totalorder %s72, %s86
      %p88 = scmp.eq.s32.totalorder %s20, 0
      %p89 = por %p87, %p88
      %s91 = sadd.s32 %s90, 1
      %p94 = scmp.eq.s32.totalorder %s14, 1
      %p95 = scmp.ne.s32.totalorder %s90, %s92
      %p96 = scmp.eq.s32.totalorder %s14, 0
      %p97 = por %p95, %p96
      %p98 = scmp.ne.s32.totalorder %s90, %s92
      %p99 = scmp.eq.s32.totalorder %s19, 1
      %p100 = por %p98, %p99
      %p101 = scmp.ne.s32.totalorder %s92, %s93
      %p102 = scmp.eq.s32.totalorder %s19, 0
      %p103 = por %p101, %p102
      %p104 = scmp.ne.s32.totalorder %s92, %s93
      %p105 = scmp.eq.s32.totalorder %s20, 1
      %p106 = por %p104, %p105
      %p108 = scmp.ne.s32.totalorder %s93, %s107
      %p109 = scmp.eq.s32.totalorder %s20, 0
      %p110 = por %p108, %p109
      %s112 = sadd.s32 %s111, 1
      %p115 = scmp.eq.s32.totalorder %s14, 1
      %p116 = scmp.ne.s32.totalorder %s111, %s113
      %p117 = scmp.eq.s32.totalorder %s14, 0
      %p118 = por %p116, %p117
      %p119 = scmp.ne.s32.totalorder %s111, %s113
      %p120 = scmp.eq.s32.totalorder %s19, 1
      %p121 = por %p119, %p120
      %p122 = scmp.ne.s32.totalorder %s113, %s114
      %p123 = scmp.eq.s32.totalorder %s19, 0
      %p124 = por %p122, %p123
      %p125 = scmp.ne.s32.totalorder %s113, %s114
      %p126 = scmp.eq.s32.totalorder %s20, 1
      %p127 = por %p125, %p126
      %p129 = scmp.ne.s32.totalorder %s114, %s128
      %p130 = scmp.eq.s32.totalorder %s20, 0
      %p131 = por %p129, %p130
      %s132 = ssub.s32 %s14, %s21
      %p133 = scmp.eq.s32.totalorder %s132, 0
      %s135 = sadd.s32 %s134, 1
      %s136 = scalar_select %p133, %s134, %s135
      %p139 = pneg %p133
      %p140 = scmp.eq.s32.totalorder %s14, 1
      %p141 = por %p139, %p140
      %p142 = scmp.ne.s32.totalorder %s134, %s137
      %p143 = scmp.eq.s32.totalorder %s14, 0
      %p144 = por %p142, %p143
      %p145 = scmp.ne.s32.totalorder %s134, %s137
      %p146 = scmp.eq.s32.totalorder %s19, 1
      %p147 = por %p145, %p146
      %p148 = scmp.ne.s32.totalorder %s137, %s138
      %p149 = scmp.eq.s32.totalorder %s19, 0
      %p150 = por %p148, %p149
      %p151 = scmp.ne.s32.totalorder %s137, %s138
      %p152 = scmp.eq.s32.totalorder %s20, 1
      %p153 = por %p151, %p152
      %p155 = scmp.ne.s32.totalorder %s138, %s154
      %p156 = scmp.eq.s32.totalorder %s20, 0
      %p157 = por %p155, %p156
      %p158 = scmp.le.s32.totalorder 1, %s14
      %p159 = scmp.lt.s32.totalorder %s14, 3
      %p160 = pnand %p158, %p159
      %p161 = pneg %p160
      // Predicated region
      $region9: #{net2_forward.1} parent=5 // pred_check
        _
      $region10: #{net2_forward.1} parent=5 // pred_check_branch
        %163 = sbr.rel (%p160) target = $region12
      $region11: #{net2_forward.1} parent=5 // pred_region
        %s164 = ssub.s32 %s14, 1
        // Predicated region
        $region13: #{net2_forward.1} parent=11 // pred_check
          %p165 = pneg %p61
        $region14: #{net2_forward.1} parent=11 // pred_check_branch
          %167 = sbr.rel (%p165) target = $region16
        $region15: #{net2_forward.1} parent=11 // pred_region
          _
        $region16: #{net2_forward.1} parent=11 // pred_fallthru
          _
        // Predicated region
        $region17: #{net2_forward.1} parent=11 // pred_check
          %p168 = pneg %p82
        $region18: #{net2_forward.1} parent=11 // pred_check_branch
          %170 = sbr.rel (%p168) target = $region20
        $region19: #{net2_forward.1} parent=11 // pred_region
          _
        $region20: #{net2_forward.1} parent=11 // pred_fallthru
          _
        // Predicated region
        $region21: #{net2_forward.1} parent=11 // pred_check
          %p171 = pneg %p103
        $region22: #{net2_forward.1} parent=11 // pred_check_branch
          %173 = sbr.rel (%p171) target = $region24
        $region23: #{net2_forward.1} parent=11 // pred_region
          _
        $region24: #{net2_forward.1} parent=11 // pred_fallthru
          _
        // Predicated region
        $region25: #{net2_forward.1} parent=11 // pred_check
          %p174 = pneg %p124
        $region26: #{net2_forward.1} parent=11 // pred_check_branch
          %176 = sbr.rel (%p174) target = $region28
        $region27: #{net2_forward.1} parent=11 // pred_region
          _
        $region28: #{net2_forward.1} parent=11 // pred_fallthru
          _
      $region12: #{net2_forward.1} parent=5 // pred_fallthru
        _
      %p177 = scmp.lt.s32.totalorder %s14, 2
      // Predicated region
      $region29: #{net2_forward.1} parent=5 // pred_check
        %p178 = pneg %p177
      $region30: #{net2_forward.1} parent=5 // pred_check_branch
        %180 = sbr.rel (%p178) target = $region32
      $region31: #{net2_forward.1} parent=5 // pred_region
        // Predicated region
        $region33: #{net2_forward.1} parent=31 // pred_check
          %p181 = pneg %p34
        $region34: #{net2_forward.1} parent=31 // pred_check_branch
          %183 = sbr.rel (%p181) target = $region36
        $region35: #{net2_forward.1} parent=31 // pred_region
          %s184 = smul.u32 2, %s14
          %p185 = scmp.lt.s32.totalorder %s184, 3
          %s186 = scalar_select %p185, %s184, 3
          %s187 = smul.addr %s186, 4
          %s188 = scalar_lea.vmem %s0, %s187
          %s189 = smul.u32 2, %s14
        $region36: #{net2_forward.1} parent=31 // pred_fallthru
          _
      $region32: #{net2_forward.1} parent=5 // pred_fallthru
        _
      %p190 = scmp.le.s32.totalorder 1, %s14
      %p191 = scmp.lt.s32.totalorder %s14, 3
      %p192 = pnand %p190, %p191
      %p193 = pneg %p192
      // Predicated region
      $region37: #{net2_forward.1} parent=5 // pred_check
        _
      $region38: #{net2_forward.1} parent=5 // pred_check_branch
        %195 = sbr.rel (%p192) target = $region40
      $region39: #{net2_forward.1} parent=5 // pred_region
        %s196 = ssub.s32 %s14, 1
        %s197 = smul.u32 2, %s19
        %p198 = scmp.lt.s32.totalorder %s197, 3
        %s199 = scalar_select %p198, %s197, 3
        %s200 = smul.addr %s199, 4
        %s201 = scalar_lea.vmem %s0, %s200
        %p202 = pneg %p40
        %p203 = pneg %p37
        %p204 = pneg %p61
        %p205 = pneg %p58
        %p206 = pneg %p82
        %p207 = pneg %p79
        %p208 = pneg %p103
        %p209 = pneg %p100
        %p210 = pneg %p124
        %p211 = pneg %p121
        %p212 = pneg %p150
        %p213 = pneg %p147
        %s214 = sand.u32 %s137, 1
        %s215 = scalar_lea.sflag [#allocation3], %s214
        %s216 = sand.u32 %s137, 1
        %s217 = smul.addr %s216, 4
        %s218 = scalar_lea.vmem [#allocation2], %s217
        %s219 = smul.u32 2, %s19
        %p220 = scmp.lt.s32.totalorder %s219, 3
        %s221 = scalar_select %p220, %s219, 3
        %s222 = smul.addr %s221, 4
        %s223 = scalar_lea.vmem %s0, %s222
        %s224 = smul.u32 2, %s19
        %s225 = smul.u32 2, %s19
        %v226 = vld [vmem:[%s223] sm:$0xff]
        %v227 = vld [vmem:[%s1] sm:$0xff]
        %v228 = vld [vmem:[%s1 + $0x8] sm:$0xff]
        %v229 = vld [vmem:[%s1 + $0x10] sm:$0xff]
        %v230 = vld [vmem:[%s1 + $0x18] sm:$0xff]
        %v231 = vld [vmem:[%s1 + $0x20] sm:$0xff]
        %v232 = vld [vmem:[%s2] sm:$0xff]
        %v233 = vld [vmem:[%s2 + $0x8] sm:$0xff]
        %v234 = vld [vmem:[%s2 + $0x10] sm:$0xff]
        %v235 = vld [vmem:[%s2 + $0x18] sm:$0xff]
        %v236 = vld [vmem:[%s2 + $0x20] sm:$0xff]
        %238 = vset.pattern.permute.xlu0 0
        %239 = vperm.xlu0 %238, %v227
        %v240 = vpop.permute.xlu0 %239
        %243 = vset.pattern.permute.xlu0 0
        %244 = vperm.xlu0 %243, %v228
        %v245 = vpop.permute.xlu0 %244
        %248 = vset.pattern.permute.xlu0 0
        %249 = vperm.xlu0 %248, %v229
        %v250 = vpop.permute.xlu0 %249
        %253 = vset.pattern.permute.xlu0 0
        %254 = vperm.xlu0 %253, %v230
        %v255 = vpop.permute.xlu0 %254
        %258 = vset.pattern.permute.xlu0 0
        %259 = vperm.xlu0 %258, %v231
        %v260 = vpop.permute.xlu0 %259
        %v263 = vlaneseq
        %v264 = vshrl.u32 %v263, 7
        %v265 = vsub.s32 0, %v264
        %v266 = vrot.slane %v226, %v265
        %v267 = vlaneseq
        %v268 = vshrl.u32 %v267, 7
        %v269 = vsub.s32 4, %v268
        %v270 = vrot.slane %v226, %v269
        %v273 = vlaneseq
        %v274 = vshrl.u32 %v273, 7
        %v275 = vsub.s32 0, %v274
        %v276 = vrot.slane %v266, %v275
        %v277 = vlaneseq
        %v278 = vshrl.u32 %v277, 7
        %v279 = vsub.s32 0, %v278
        %v280 = vrot.slane %v270, %v279
        %v281 = vmul.f32 %v240, %v276
        %v282 = vmul.f32 %v240, %v280
        %v283 = vmul.f32 %v245, %v276
        %v284 = vmul.f32 %v245, %v280
        %v285 = vmul.f32 %v250, %v276
        %v286 = vmul.f32 %v250, %v280
        %v287 = vmul.f32 %v255, %v276
        %v288 = vmul.f32 %v255, %v280
        %v289 = vmul.f32 %v260, %v276
        %v290 = vmul.f32 %v260, %v280
        %292 = vset.pattern.permute.xlu0 0
        %293 = vperm.xlu0 %292, %v232
        %v294 = vpop.permute.xlu0 %293
        %297 = vset.pattern.permute.xlu0 0
        %298 = vperm.xlu0 %297, %v233
        %v299 = vpop.permute.xlu0 %298
        %302 = vset.pattern.permute.xlu0 0
        %303 = vperm.xlu0 %302, %v234
        %v304 = vpop.permute.xlu0 %303
        %307 = vset.pattern.permute.xlu0 0
        %308 = vperm.xlu0 %307, %v235
        %v309 = vpop.permute.xlu0 %308
        %312 = vset.pattern.permute.xlu0 0
        %313 = vperm.xlu0 %312, %v236
        %v314 = vpop.permute.xlu0 %313
        %v316 = vadd.f32 %v294, %v281
        %v317 = vadd.f32 %v294, %v282
        %v318 = vadd.f32 %v299, %v283
        %v319 = vadd.f32 %v299, %v284
        %v320 = vadd.f32 %v304, %v285
        %v321 = vadd.f32 %v304, %v286
        %v322 = vadd.f32 %v309, %v287
        %v323 = vadd.f32 %v309, %v288
        %v324 = vadd.f32 %v314, %v289
        %v325 = vadd.f32 %v314, %v290
        %326 = vset.pattern.permute.xlu0 1
        %327 = vperm.xlu0 %326, %v227
        %v328 = vpop.permute.xlu0 %327
        %330 = vset.pattern.permute.xlu0 1
        %331 = vperm.xlu0 %330, %v228
        %v332 = vpop.permute.xlu0 %331
        %334 = vset.pattern.permute.xlu0 1
        %335 = vperm.xlu0 %334, %v229
        %v336 = vpop.permute.xlu0 %335
        %338 = vset.pattern.permute.xlu0 1
        %339 = vperm.xlu0 %338, %v230
        %v340 = vpop.permute.xlu0 %339
        %342 = vset.pattern.permute.xlu0 1
        %343 = vperm.xlu0 %342, %v231
        %v344 = vpop.permute.xlu0 %343
        %v346 = vlaneseq
        %v347 = vshrl.u32 %v346, 7
        %v348 = vsub.s32 1, %v347
        %v349 = vrot.slane %v226, %v348
        %v350 = vlaneseq
        %v351 = vshrl.u32 %v350, 7
        %v352 = vsub.s32 5, %v351
        %v353 = vrot.slane %v226, %v352
        %v356 = vlaneseq
        %v357 = vshrl.u32 %v356, 7
        %v358 = vsub.s32 1, %v357
        %v359 = vrot.slane %v349, %v358
        %v360 = vlaneseq
        %v361 = vshrl.u32 %v360, 7
        %v362 = vsub.s32 1, %v361
        %v363 = vrot.slane %v353, %v362
        %v364 = vmul.f32 %v328, %v359
        %v365 = vmul.f32 %v328, %v363
        %v366 = vmul.f32 %v332, %v359
        %v367 = vmul.f32 %v332, %v363
        %v368 = vmul.f32 %v336, %v359
        %v369 = vmul.f32 %v336, %v363
        %v370 = vmul.f32 %v340, %v359
        %v371 = vmul.f32 %v340, %v363
        %v372 = vmul.f32 %v344, %v359
        %v373 = vmul.f32 %v344, %v363
        %v374 = vadd.f32 %v316, %v364
        %v375 = vadd.f32 %v317, %v365
        %v376 = vadd.f32 %v318, %v366
        %v377 = vadd.f32 %v319, %v367
        %v378 = vadd.f32 %v320, %v368
        %v379 = vadd.f32 %v321, %v369
        %v380 = vadd.f32 %v322, %v370
        %v381 = vadd.f32 %v323, %v371
        %v382 = vadd.f32 %v324, %v372
        %v383 = vadd.f32 %v325, %v373
        %384 = vset.pattern.permute.xlu0 2
        %385 = vperm.xlu0 %384, %v227
        %v386 = vpop.permute.xlu0 %385
        %388 = vset.pattern.permute.xlu0 2
        %389 = vperm.xlu0 %388, %v228
        %v390 = vpop.permute.xlu0 %389
        %392 = vset.pattern.permute.xlu0 2
        %393 = vperm.xlu0 %392, %v229
        %v394 = vpop.permute.xlu0 %393
        %396 = vset.pattern.permute.xlu0 2
        %397 = vperm.xlu0 %396, %v230
        %v398 = vpop.permute.xlu0 %397
        %400 = vset.pattern.permute.xlu0 2
        %401 = vperm.xlu0 %400, %v231
        %v402 = vpop.permute.xlu0 %401
        %v404 = vlaneseq
        %v405 = vshrl.u32 %v404, 7
        %v406 = vsub.s32 2, %v405
        %v407 = vrot.slane %v226, %v406
        %v408 = vlaneseq
        %v409 = vshrl.u32 %v408, 7
        %v410 = vsub.s32 6, %v409
        %v411 = vrot.slane %v226, %v410
        %v414 = vlaneseq
        %v415 = vshrl.u32 %v414, 7
        %v416 = vsub.s32 2, %v415
        %v417 = vrot.slane %v407, %v416
        %v418 = vlaneseq
        %v419 = vshrl.u32 %v418, 7
        %v420 = vsub.s32 2, %v419
        %v421 = vrot.slane %v411, %v420
        %v422 = vmul.f32 %v386, %v417
        %v423 = vmul.f32 %v386, %v421
        %v424 = vmul.f32 %v390, %v417
        %v425 = vmul.f32 %v390, %v421
        %v426 = vmul.f32 %v394, %v417
        %v427 = vmul.f32 %v394, %v421
        %v428 = vmul.f32 %v398, %v417
        %v429 = vmul.f32 %v398, %v421
        %v430 = vmul.f32 %v402, %v417
        %v431 = vmul.f32 %v402, %v421
        %v432 = vadd.f32 %v374, %v422
        %v433 = vadd.f32 %v375, %v423
        %v434 = vadd.f32 %v376, %v424
        %v435 = vadd.f32 %v377, %v425
        %v436 = vadd.f32 %v378, %v426
        %v437 = vadd.f32 %v379, %v427
        %v438 = vadd.f32 %v380, %v428
        %v439 = vadd.f32 %v381, %v429
        %v440 = vadd.f32 %v382, %v430
        %v441 = vadd.f32 %v383, %v431
        %442 = vset.pattern.permute.xlu0 3
        %443 = vperm.xlu0 %442, %v227
        %v444 = vpop.permute.xlu0 %443
        %446 = vset.pattern.permute.xlu0 3
        %447 = vperm.xlu0 %446, %v228
        %v448 = vpop.permute.xlu0 %447
        %450 = vset.pattern.permute.xlu0 3
        %451 = vperm.xlu0 %450, %v229
        %v452 = vpop.permute.xlu0 %451
        %454 = vset.pattern.permute.xlu0 3
        %455 = vperm.xlu0 %454, %v230
        %v456 = vpop.permute.xlu0 %455
        %458 = vset.pattern.permute.xlu0 3
        %459 = vperm.xlu0 %458, %v231
        %v460 = vpop.permute.xlu0 %459
        %v462 = vlaneseq
        %v463 = vshrl.u32 %v462, 7
        %v464 = vsub.s32 3, %v463
        %v465 = vrot.slane %v226, %v464
        %v466 = vlaneseq
        %v467 = vshrl.u32 %v466, 7
        %v468 = vsub.s32 7, %v467
        %v469 = vrot.slane %v226, %v468
        %v472 = vlaneseq
        %v473 = vshrl.u32 %v472, 7
        %v474 = vsub.s32 3, %v473
        %v475 = vrot.slane %v465, %v474
        %v476 = vlaneseq
        %v477 = vshrl.u32 %v476, 7
        %v478 = vsub.s32 3, %v477
        %v479 = vrot.slane %v469, %v478
        %v480 = vmul.f32 %v444, %v475
        %v481 = vmul.f32 %v444, %v479
        %v482 = vmul.f32 %v448, %v475
        %v483 = vmul.f32 %v448, %v479
        %v484 = vmul.f32 %v452, %v475
        %v485 = vmul.f32 %v452, %v479
        %v486 = vmul.f32 %v456, %v475
        %v487 = vmul.f32 %v456, %v479
        %v488 = vmul.f32 %v460, %v475
        %v489 = vmul.f32 %v460, %v479
        %v490 = vadd.f32 %v432, %v480
        %v491 = vadd.f32 %v433, %v481
        %v492 = vadd.f32 %v434, %v482
        %v493 = vadd.f32 %v435, %v483
        %v494 = vadd.f32 %v436, %v484
        %v495 = vadd.f32 %v437, %v485
        %v496 = vadd.f32 %v438, %v486
        %v497 = vadd.f32 %v439, %v487
        %v498 = vadd.f32 %v440, %v488
        %v499 = vadd.f32 %v441, %v489
        %v500 = vmax.f32 %v490, 0.0
        %v501 = vmax.f32 %v491, 0.0
        %v502 = vmax.f32 %v492, 0.0
        %v503 = vmax.f32 %v493, 0.0
        %v504 = vmax.f32 %v494, 0.0
        %v505 = vmax.f32 %v495, 0.0
        %v506 = vmax.f32 %v496, 0.0
        %v507 = vmax.f32 %v497, 0.0
        %v508 = vmax.f32 %v498, 0.0
        %v509 = vmax.f32 %v499, 0.0
        %v510 = vld [vmem:[%s4] sm:$0x3]
        %v511 = vld [vmem:[%s3] sm:$0x3]
        %vm512 = vcmask 326656
        %v514 = vsel %vm512, %v511, 0
        %516 = vmatprep.subr.mxu0 %v501
        %517 = vmatpush1.msra.mxu0 %v500
        %518 = vmatprep.subr.mxu0 %v503
        %519 = vmatpush1.msra.mxu0 %v502
        %520 = vmatprep.subr.mxu0 %v505
        %521 = vmatpush1.msra.mxu0 %v504
        %522 = vmatprep.subr.mxu0 %v507
        %523 = vmatpush1.msra.mxu0 %v506
        %524 = vmatprep.subr.mxu0 %v509
        %525 = vmatpush1.msra.mxu0 %v508
        %526 = vmatprep.subr.mxu0 0.0
        %527 = vmatpush1.msra.mxu0 0.0
        %528 = vmatprep.subr.mxu0 0.0
        %529 = vmatpush1.msra.mxu0 0.0
        %530 = vmatprep.subr.mxu0 0.0
        %531 = vmatpush1.msra.mxu0 0.0
        %532 = vmatprep.subr.mxu0 0.0
        %533 = vmatpush1.msra.mxu0 0.0
        %534 = vmatprep.subr.mxu0 0.0
        %535 = vmatpush1.msra.mxu0 0.0
        %536 = vmatprep.subr.mxu0 0.0
        %537 = vmatpush1.msra.mxu0 0.0
        %538 = vmatprep.subr.mxu0 0.0
        %539 = vmatpush1.msra.mxu0 0.0
        %540 = vmatprep.subr.mxu0 0.0
        %541 = vmatpush1.msra.mxu0 0.0
        %542 = vmatprep.subr.mxu0 0.0
        %543 = vmatpush1.msra.mxu0 0.0
        %544 = vmatprep.subr.mxu0 0.0
        %545 = vmatpush1.msra.mxu0 0.0
        %546 = vmatprep.subr.mxu0 0.0
        %547 = vmatpush1.msra.mxu0 0.0
        %548 = vmatprep.subr.mxu0 0.0
        %549 = vmatpush1.msra.mxu0 0.0
        %550 = vmatprep.subr.mxu0 0.0
        %551 = vmatpush1.msra.mxu0 0.0
        %552 = vmatprep.subr.mxu0 0.0
        %553 = vmatpush1.msra.mxu0 0.0
        %554 = vmatprep.subr.mxu0 0.0
        %555 = vmatpush1.msra.mxu0 0.0
        %556 = vmatprep.subr.mxu0 0.0
        %557 = vmatpush1.msra.mxu0 0.0
        %558 = vmatprep.subr.mxu0 0.0
        %559 = vmatpush1.msra.mxu0 0.0
        %560 = vmatprep.subr.mxu0 0.0
        %561 = vmatpush1.msra.mxu0 0.0
        %562 = vmatprep.subr.mxu0 0.0
        %563 = vmatpush1.msra.mxu0 0.0
        %564 = vmatprep.subr.mxu0 0.0
        %565 = vmatpush1.msra.mxu0 0.0
        %566 = vmatprep.subr.mxu0 0.0
        %567 = vmatpush1.msra.mxu0 0.0
        %568 = vmatprep.subr.mxu0 0.0
        %569 = vmatpush1.msra.mxu0 0.0
        %570 = vmatprep.subr.mxu0 0.0
        %571 = vmatpush1.msra.mxu0 0.0
        %572 = vmatprep.subr.mxu0 0.0
        %573 = vmatpush1.msra.mxu0 0.0
        %574 = vmatprep.subr.mxu0 0.0
        %575 = vmatpush1.msra.mxu0 0.0
        %576 = vmatprep.subr.mxu0 0.0
        %577 = vmatpush1.msra.mxu0 0.0
        %578 = vmatprep.subr.mxu0 0.0
        %579 = vmatpush1.msra.mxu0 0.0
        %580 = vmatprep.mubr.f32.mxu0 0.0
        %581 = vmatmul.mubr.f32.gmra.mrb[0].mxu0 %v514
        %v582 = vpop.f32.mrb[0].mxu0
        %v583 = vadd.f32 0.0, %v582
        %v584 = vpop.f32.mrb[0].mxu0
        %v585 = vadd.f32 0.0, %v584
        %586 = vdwg.mxu0
        %588 = vset.pattern.permute.xlu0 0
        %589 = vperm.xlu0 %588, %v510
        %v590 = vpop.permute.xlu0 %589
        %v592 = vadd.f32 %v590, %v583
        %v593 = vadd.f32 %v590, %v585
        %v596 = vcombine.low %v592, %v593
        %v598 = vunpack.c.l.s4 1983009808
        %v599 = vunpack.c.0.s8 %v598
        %v600 = vlaneseq
        %v601 = vshrl.u32 %v600, 7
        %v602 = vsub.s32 %v599, %v601
        %v603 = vrot.slane %v596, %v602
        %605 = vst [vmem:[%s218] sm:$0xf] %v603
        %s606 = sand.u32 %s137, 1
        %s607 = scalar_lea.sflag [#allocation3], %s606
        %s608 = sand.u32 %s137, 1
        %s609 = smul.addr %s608, 4
        %s610 = scalar_lea.vmem [#allocation2], %s609
        // Predicated region
        $region41: #{net2_forward.1} parent=39 // pred_check
          %p611 = pneg %p147
        $region42: #{net2_forward.1} parent=39 // pred_check_branch
          %613 = sbr.rel (%p611) target = $region44
        $region43: #{net2_forward.1} parent=39 // pred_region
          %s614 = smul.u32 2, %s19
          %s616 = ssub.s32 64, 64
          %617 = vsyncadd %s607, %s616
          %s618 = smul.addr %s614, 32
          %s619 = scalar_lea.hbm %s5, %s618
          %s621 = sshll.u32 %s610, 4
          %s622 = int_to_ptr.vmem [resolvable:$true] %s621
          %624 = dma.vmem_to_hbm [thread:$0]  %s622, 64, %s619, %s607
        $region44: #{net2_forward.1} parent=39 // pred_fallthru
          _
      $region40: #{net2_forward.1} parent=5 // pred_fallthru
        _
      %p625 = scmp.le.s32.totalorder 2, %s14
      // Predicated region
      $region45: #{net2_forward.1} parent=5 // pred_check
        %p626 = pneg %p625
      $region46: #{net2_forward.1} parent=5 // pred_check_branch
        %628 = sbr.rel (%p626) target = $region48
      $region47: #{net2_forward.1} parent=5 // pred_region
        %s629 = ssub.s32 %s14, 2
        // Predicated region
        $region49: #{net2_forward.1} parent=47 // pred_check
          %p630 = pneg %p153
        $region50: #{net2_forward.1} parent=47 // pred_check_branch
          %632 = sbr.rel (%p630) target = $region52
        $region51: #{net2_forward.1} parent=47 // pred_region
          %s633 = sand.u32 %s138, 1
          %s634 = scalar_lea.sflag [#allocation3], %s633
          %s635 = sand.u32 %s138, 1
          %s636 = smul.addr %s635, 4
          %s637 = scalar_lea.vmem [#allocation2], %s636
          %638 = dma.done %s634, 64
        $region52: #{net2_forward.1} parent=47 // pred_fallthru
          _
      $region48: #{net2_forward.1} parent=5 // pred_fallthru
        _
    $region6: #{net2_forward.1} parent=1 // loop_footer
      %s18 = sadd.s32 1, %s14
    $region7: #{net2_forward.1} parent=1 // loop_footer_branch
      %13 = sbr.rel target = $region3
    $region8: #{net2_forward.1} parent=1 // loop_exit
      _
    %639 = vsyncpa [#allocation3], 1
    %s640 = scalar_lea.sflag [#allocation3], 1
    %641 = vsyncpa %s640, 1

</llo_original>
